<compile_context>
chip_gen: v7x
topology: tpu7x:2x2x1
jax: 0.10.0
libtpu: 0.0.40
codegen_flags: <defaults>
</compile_context>

<pallas_src>
import math
from functools import partial

import jax
import jax.numpy as jnp
from jax.experimental import pallas as pl
from jax.experimental.pallas import tpu as pltpu

EPS = 1e-06
LOG_STD_MAX = 2.0
LOG_STD_MIN = -20.0
_HALF_LOG_2PI = 0.5 * math.log(2.0 * math.pi)  # folds to an immediate in-kernel


def _round_up(n: int, m: int) -> int:
    return ((n + m - 1) // m) * m


def policy_kernel(
    scale_ref,        # SMEM [1]        action_scale (runtime scalar)
    x_ref,            # VMEM [TB, IN]
    w1_ref, b1_ref,   # VMEM [IN, H1], [1, H1]   (resident across the batch grid)
    w2_ref, b2_ref,   # VMEM [H1, H2], [1, H2]
    wh_ref, bh_ref,   # VMEM [H2, 2A], [1, 2A]   fused [mu | log_std] heads
    noise_ref,        # VMEM [TB, A]    standard-normal rsample noise
    out_ref,          # VMEM [TB, 2A+1] packed [pi_scaled | mu_scaled | logp_pi] (f32)
):
    in_dt = x_ref.dtype  # f32, or bf16 when use_bf16=True
    x = x_ref[...]

    # MLP "net": tanh on every layer (activation == output_activation == tanh).
    # MXU accumulates in f32; hidden activations are cast back to the input
    # dtype so the next matmul's operands stay bf16 in the bf16 path.
    h = jnp.tanh(
        jnp.dot(x, w1_ref[...], preferred_element_type=jnp.float32)
        + b1_ref[...].astype(jnp.float32)
    ).astype(in_dt)
    h = jnp.tanh(
        jnp.dot(h, w2_ref[...], preferred_element_type=jnp.float32)
        + b2_ref[...].astype(jnp.float32)
    ).astype(in_dt)

    # Fused heads: one MXU pass yields [mu | log_std_raw] in f32.
    heads = (
        jnp.dot(h, wh_ref[...], preferred_element_type=jnp.float32)
        + bh_ref[...].astype(jnp.float32)
    )
    a = noise_ref.shape[1]
    mu = heads[:, :a]
    ls_raw = jnp.tanh(heads[:, a:])

    # Rescale log_std into [LOG_STD_MIN, LOG_STD_MAX]; epilogue all in f32.
    log_std = LOG_STD_MIN + 0.5 * (LOG_STD_MAX - LOG_STD_MIN) * (ls_raw + 1.0)
    std = jnp.exp(log_std)

    # Reparameterized sample: pi = mu + std * eps, so (pi - mu)/std == eps.
    eps = noise_ref[...].astype(jnp.float32)
    pi = mu + std * eps

    # Squashing (forward value of _clip_but_pass_gradient == clip to [0, 1]).
    mu_t = jnp.tanh(mu)
    pi_t = jnp.tanh(pi)
    one_minus_pi2 = jnp.clip(1.0 - pi_t * pi_t, 0.0, 1.0)

    # Normal log_prob + tanh-squash correction, merged into ONE reduction.
    logp_elem = (-0.5 * (eps * eps) - log_std - _HALF_LOG_2PI) - jnp.log(
        one_minus_pi2 + EPS
    )
    logp_pi = jnp.sum(logp_elem, axis=1, keepdims=True)

    # Direct lane-slice stores (no in-kernel concatenate / extra VMEM copy).
    scale = scale_ref[0]
    out_ref[:, :a] = (pi_t * scale).astype(out_ref.dtype)
    out_ref[:, a:2 * a] = (mu_t * scale).astype(out_ref.dtype)
    out_ref[:, 2 * a:] = logp_pi.astype(out_ref.dtype)


def prepare_params(params):
    """One-time fusion of the mu / log_std heads into a single [H2, 2A] matmul."""
    return {
        "w1": params["w1"], "b1": params["b1"],
        "w2": params["w2"], "b2": params["b2"],
        "wh": jnp.concatenate([params["wmu"], params["wls"]], axis=1),
        "bh": jnp.concatenate([params["bmu"], params["bls"]], axis=1),
    }


@partial(jax.jit, static_argnames=("use_bf16", "tile_b_max"))
def gaussian_policy_forward(x, fused, noise, action_scale, *,
                            use_bf16=False, tile_b_max=1024):
    """x: [B, IN] f32, fused: prepare_params(...) dict, noise: [B, A] f32.

    Returns (pi_scaled [B, A], mu_scaled [B, A], logp_pi [B]) in f32.
    """
    B, IN = x.shape
    if B < 1:
        raise ValueError("batch size must be >= 1")
    H1 = fused["w1"].shape[1]
    H2 = fused["w2"].shape[1]
    A = noise.shape[1]
    out_w = 2 * A + 1

    # ---- batch tiling: big tiles, minimal padding -------------------------
    num_tiles = pl.cdiv(B, tile_b_max)
    if num_tiles == 1 and B >= 512:
        num_tiles = 2                      # let v7x's two TensorCores both work
    if num_tiles > 1 and num_tiles % 2 != 0:
        num_tiles += 1                     # even tile count splits cleanly 2-way
    tile_b = _round_up(pl.cdiv(B, num_tiles), 8)
    Bp = num_tiles * tile_b
    if Bp != B:
        pad = Bp - B
        x = jnp.pad(x, ((0, pad), (0, 0)))
        noise = jnp.pad(noise, ((0, pad), (0, 0)))

    # ---- optional bf16 cast of streamed inputs + resident weights ---------
    w1, b1, w2, b2, wh, bh = (fused[k] for k in ("w1", "b1", "w2", "b2", "wh", "bh"))
    if use_bf16:
        cast = lambda t: t.astype(jnp.bfloat16)
        x, noise, w1, b1, w2, b2, wh, bh = map(
            cast, (x, noise, w1, b1, w2, b2, wh, bh))
    in_bytes = 2 if use_bf16 else 4

    # ---- explicit VMEM budget (v5e scoped default is only 16 MiB) ---------
    stream_bytes = tile_b * (IN + A) * in_bytes + tile_b * out_w * 4
    resident_bytes = (IN * H1 + H1 + H1 * H2 + H2 + H2 * 2 * A + 2 * A) * in_bytes
    vmem_limit = int(min(64 << 20, max(16 << 20, 4 * (stream_bytes + resident_bytes))))

    # ---- advisory cost estimate so XLA can overlap surrounding ops --------
    cost = pl.CostEstimate(
        flops=int(2 * Bp * (IN * H1 + H1 * H2 + H2 * 2 * A) + 16 * Bp * A),
        transcendentals=int(Bp * (H1 + H2 + 5 * A)),
        bytes_accessed=int(
            (Bp * IN + Bp * A) * in_bytes
            + (IN * H1 + H1 + H1 * H2 + H2 + H2 * 2 * A + 2 * A) * in_bytes
            + Bp * out_w * 4
        ),
    )

    scale = jnp.reshape(jnp.asarray(action_scale, jnp.float32), (1,))

    packed = pl.pallas_call(
        policy_kernel,
        out_shape=jax.ShapeDtypeStruct((Bp, out_w), jnp.float32),
        grid=(num_tiles,),
        in_specs=[
            pl.BlockSpec(memory_space=pltpu.MemorySpace.SMEM),     # action_scale
            pl.BlockSpec((tile_b, IN), lambda i: (i, 0)),          # x (blocked)
            pl.BlockSpec((IN, H1), lambda i: (0, 0)),              # w1 (resident)
            pl.BlockSpec((1, H1), lambda i: (0, 0)),               # b1
            pl.BlockSpec((H1, H2), lambda i: (0, 0)),              # w2
            pl.BlockSpec((1, H2), lambda i: (0, 0)),               # b2
            pl.BlockSpec((H2, 2 * A), lambda i: (0, 0)),           # fused head W
            pl.BlockSpec((1, 2 * A), lambda i: (0, 0)),            # fused head b
            pl.BlockSpec((tile_b, A), lambda i: (i, 0)),           # noise (blocked)
        ],
        out_specs=pl.BlockSpec((tile_b, out_w), lambda i: (i, 0)),
        compiler_params=pltpu.CompilerParams(
            dimension_semantics=("parallel",),
            vmem_limit_bytes=vmem_limit,
        ),
        cost_estimate=cost,
    )(scale, x, w1, b1, w2, b2, wh, bh, noise)

    packed = packed[:B]
    pi_scaled = packed[:, :A]
    mu_scaled = packed[:, A:2 * A]
    logp_pi = packed[:, 2 * A]
    return pi_scaled, mu_scaled, logp_pi


def init_params(key, in_features, hidden_sizes, action_dim):
    h1, h2 = hidden_sizes
    k1, k2, k3, k4 = jax.random.split(key, 4)
    scale = 0.1
    return {
        "w1": scale * jax.random.normal(k1, (in_features, h1), jnp.float32),
        "b1": jnp.zeros((1, h1), jnp.float32),  # nn.init.zeros_ on MLP biases
        "w2": scale * jax.random.normal(k2, (h1, h2), jnp.float32),
        "b2": jnp.zeros((1, h2), jnp.float32),
        "wmu": scale * jax.random.normal(k3, (h2, action_dim), jnp.float32),
        "bmu": jnp.zeros((1, action_dim), jnp.float32),
        "wls": scale * jax.random.normal(k4, (h2, action_dim), jnp.float32),
        "bls": jnp.zeros((1, action_dim), jnp.float32),
    }


def reference_forward(x, params, noise, action_scale):
    """Pure-JAX reference mirroring the PyTorch module's forward pass."""
    h = jnp.tanh(x @ params["w1"] + params["b1"])
    h = jnp.tanh(h @ params["w2"] + params["b2"])
    mu = h @ params["wmu"] + params["bmu"]
    ls = jnp.tanh(h @ params["wls"] + params["bls"])
    log_std = LOG_STD_MIN + 0.5 * (LOG_STD_MAX - LOG_STD_MIN) * (ls + 1.0)
    std = jnp.exp(log_std)
    pi = mu + std * noise
    logp = jnp.sum(-0.5 * noise * noise - log_std - _HALF_LOG_2PI, axis=1)
    mu_t = jnp.tanh(mu)
    pi_t = jnp.tanh(pi)
    logp = logp - jnp.sum(
        jnp.log(jnp.clip(1.0 - pi_t * pi_t, 0.0, 1.0) + EPS), axis=1
    )
    return pi_t * action_scale, mu_t * action_scale, logp


if __name__ == "__main__":
    # Small, forward-implied shapes: batch=8, obs dim=32, hidden=(32,32), A=4.
    B, IN, H, A = 8, 32, 32, 4
    action_scale = 2.0

    root = jax.random.PRNGKey(0)
    kx, kn, kp, kx2, kn2 = jax.random.split(root, 5)

    x = jax.random.normal(kx, (B, IN), jnp.float32)
    noise = jax.random.normal(kn, (B, A), jnp.float32)  # rsample's standard-normal eps
    params = init_params(kp, IN, (H, H), A)
    fused = prepare_params(params)  # one-time head fusion (off the hot path)

    # --- f32 path: exact parity with the PyTorch float32 module ------------
    pi_scaled, mu_scaled, logp_pi = gaussian_policy_forward(
        x, fused, noise, action_scale
    )
    jax.block_until_ready((pi_scaled, mu_scaled, logp_pi))

    assert pi_scaled.shape == (B, A)
    assert mu_scaled.shape == (B, A)
    assert logp_pi.shape == (B,)

    pi_ref, mu_ref, lp_ref = reference_forward(x, params, noise, action_scale)
    assert jnp.allclose(pi_scaled, pi_ref, rtol=1e-4, atol=1e-4)
    assert jnp.allclose(mu_scaled, mu_ref, rtol=1e-4, atol=1e-4)
    assert jnp.allclose(logp_pi, lp_ref, rtol=1e-4, atol=1e-4)

    # --- odd batch: exercises sublane-padding + slice-off path -------------
    B2 = 13
    x2 = jax.random.normal(kx2, (B2, IN), jnp.float32)
    noise2 = jax.random.normal(kn2, (B2, A), jnp.float32)
    pi2, mu2, lp2 = gaussian_policy_forward(x2, fused, noise2, action_scale)
    jax.block_until_ready((pi2, mu2, lp2))
    pi2_r, mu2_r, lp2_r = reference_forward(x2, params, noise2, action_scale)
    assert pi2.shape == (B2, A) and lp2.shape == (B2,)
    assert jnp.allclose(pi2, pi2_r, rtol=1e-4, atol=1e-4)
    assert jnp.allclose(mu2, mu2_r, rtol=1e-4, atol=1e-4)
    assert jnp.allclose(lp2, lp2_r, rtol=1e-4, atol=1e-4)

    # --- bf16 path (halved DMA bytes on v6e/v7x); looser tolerance ---------
    pi_b, mu_b, lp_b = gaussian_policy_forward(
        x, fused, noise, action_scale, use_bf16=True
    )
    jax.block_until_ready((pi_b, mu_b, lp_b))
    assert jnp.allclose(pi_b, pi_ref, rtol=5e-2, atol=5e-2)
    assert jnp.allclose(mu_b, mu_ref, rtol=5e-2, atol=5e-2)
    assert jnp.allclose(lp_b, lp_ref, rtol=5e-2, atol=5e-1)

    print("KERNEL_OK")
</pallas_src>

<mosaic_0001>
module attributes {stable_mosaic.version = 11 : i64} {
  func.func @policy_kernel(%arg0: i32, %arg1: memref<1xf32, #tpu.memory_space<smem>>, %arg2: memref<8x32xf32, #tpu.memory_space<vmem>>, %arg3: memref<32x32xf32, #tpu.memory_space<vmem>>, %arg4: memref<1x32xf32, #tpu.memory_space<vmem>>, %arg5: memref<32x32xf32, #tpu.memory_space<vmem>>, %arg6: memref<1x32xf32, #tpu.memory_space<vmem>>, %arg7: memref<32x8xf32, #tpu.memory_space<vmem>>, %arg8: memref<1x8xf32, #tpu.memory_space<vmem>>, %arg9: memref<8x4xf32, #tpu.memory_space<vmem>>, %arg10: memref<8x9xf32, #tpu.memory_space<vmem>>) attributes {dimension_semantics = [#tpu.dimension_semantics<parallel>], iteration_bounds = array<i64: 1>, scalar_prefetch = 0 : i64, scratch_operands = 0 : i64, tpu.core_type = #tpu.core_type<tc>, window_params = [{transform_indices = @transform_0, window_bounds = array<i64: 1>}, {transform_indices = @transform_1, window_bounds = array<i64: 8, 32>}, {pipeline_mode = #tpu.pipeline_mode<synchronous>, transform_indices = @transform_2, window_bounds = array<i64: 32, 32>}, {pipeline_mode = #tpu.pipeline_mode<synchronous>, transform_indices = @transform_3, window_bounds = array<i64: 1, 32>}, {pipeline_mode = #tpu.pipeline_mode<synchronous>, transform_indices = @transform_4, window_bounds = array<i64: 32, 32>}, {pipeline_mode = #tpu.pipeline_mode<synchronous>, transform_indices = @transform_5, window_bounds = array<i64: 1, 32>}, {pipeline_mode = #tpu.pipeline_mode<synchronous>, transform_indices = @transform_6, window_bounds = array<i64: 32, 8>}, {pipeline_mode = #tpu.pipeline_mode<synchronous>, transform_indices = @transform_7, window_bounds = array<i64: 1, 8>}, {transform_indices = @transform_8, window_bounds = array<i64: 8, 4>}, {transform_indices = @transform_9, window_bounds = array<i64: 8, 9>}]} {
    %c0 = arith.constant 0 : index
    %c0_0 = arith.constant 0 : index
    %0 = vector.load %arg2[%c0, %c0_0] : memref<8x32xf32, #tpu.memory_space<vmem>>, vector<8x32xf32>
    %c0_1 = arith.constant 0 : index
    %c0_2 = arith.constant 0 : index
    %1 = vector.load %arg3[%c0_1, %c0_2] : memref<32x32xf32, #tpu.memory_space<vmem>>, vector<32x32xf32>
    %cst = arith.constant dense<0.000000e+00> : vector<8x32xf32>
    %2 = tpu.matmul %0, %1, %cst {dimension_numbers = #tpu.dot_dimension_numbers<[1], [0], [0], [1], [0, 0, 1, 1], [], []>} : vector<8x32xf32>, vector<32x32xf32>, vector<8x32xf32> -> vector<8x32xf32>
    %c0_3 = arith.constant 0 : index
    %c0_4 = arith.constant 0 : index
    %3 = vector.load %arg4[%c0_3, %c0_4] : memref<1x32xf32, #tpu.memory_space<vmem>>, vector<1x32xf32>
    %4 = vector.broadcast %3 : vector<1x32xf32> to vector<8x32xf32>
    %5 = arith.addf %2, %4 : vector<8x32xf32>
    %6 = math.tanh %5 : vector<8x32xf32>
    %c0_5 = arith.constant 0 : index
    %c0_6 = arith.constant 0 : index
    %7 = vector.load %arg5[%c0_5, %c0_6] : memref<32x32xf32, #tpu.memory_space<vmem>>, vector<32x32xf32>
    %cst_7 = arith.constant dense<0.000000e+00> : vector<8x32xf32>
    %8 = tpu.matmul %6, %7, %cst_7 {dimension_numbers = #tpu.dot_dimension_numbers<[1], [0], [0], [1], [0, 0, 1, 1], [], []>} : vector<8x32xf32>, vector<32x32xf32>, vector<8x32xf32> -> vector<8x32xf32>
    %c0_8 = arith.constant 0 : index
    %c0_9 = arith.constant 0 : index
    %9 = vector.load %arg6[%c0_8, %c0_9] : memref<1x32xf32, #tpu.memory_space<vmem>>, vector<1x32xf32>
    %10 = vector.broadcast %9 : vector<1x32xf32> to vector<8x32xf32>
    %11 = arith.addf %8, %10 : vector<8x32xf32>
    %12 = math.tanh %11 : vector<8x32xf32>
    %c0_10 = arith.constant 0 : index
    %c0_11 = arith.constant 0 : index
    %13 = vector.load %arg7[%c0_10, %c0_11] : memref<32x8xf32, #tpu.memory_space<vmem>>, vector<32x8xf32>
    %cst_12 = arith.constant dense<0.000000e+00> : vector<8x8xf32>
    %14 = tpu.matmul %12, %13, %cst_12 {dimension_numbers = #tpu.dot_dimension_numbers<[1], [0], [0], [1], [0, 0, 1, 1], [], []>} : vector<8x32xf32>, vector<32x8xf32>, vector<8x8xf32> -> vector<8x8xf32>
    %c0_13 = arith.constant 0 : index
    %c0_14 = arith.constant 0 : index
    %15 = vector.load %arg8[%c0_13, %c0_14] : memref<1x8xf32, #tpu.memory_space<vmem>>, vector<1x8xf32>
    %16 = vector.broadcast %15 : vector<1x8xf32> to vector<8x8xf32>
    %17 = arith.addf %14, %16 : vector<8x8xf32>
    %18 = vector.extract_strided_slice %17 {offsets = [0, 0], sizes = [8, 4], strides = [1, 1]} : vector<8x8xf32> to vector<8x4xf32>
    %19 = vector.extract_strided_slice %17 {offsets = [0, 4], sizes = [8, 4], strides = [1, 1]} : vector<8x8xf32> to vector<8x4xf32>
    %20 = math.tanh %19 : vector<8x4xf32>
    %cst_15 = arith.constant 1.000000e+00 : f32
    %21 = vector.broadcast %cst_15 : f32 to vector<8x4xf32>
    %22 = arith.addf %20, %21 : vector<8x4xf32>
    %cst_16 = arith.constant 1.100000e+01 : f32
    %23 = vector.broadcast %cst_16 : f32 to vector<8x4xf32>
    %24 = arith.mulf %23, %22 : vector<8x4xf32>
    %cst_17 = arith.constant -2.000000e+01 : f32
    %25 = vector.broadcast %cst_17 : f32 to vector<8x4xf32>
    %26 = arith.addf %25, %24 : vector<8x4xf32>
    %27 = math.exp %26 : vector<8x4xf32>
    %c0_18 = arith.constant 0 : index
    %c0_19 = arith.constant 0 : index
    %28 = vector.load %arg9[%c0_18, %c0_19] : memref<8x4xf32, #tpu.memory_space<vmem>>, vector<8x4xf32>
    %29 = arith.mulf %27, %28 : vector<8x4xf32>
    %30 = arith.addf %18, %29 : vector<8x4xf32>
    %31 = math.tanh %18 : vector<8x4xf32>
    %32 = math.tanh %30 : vector<8x4xf32>
    %33 = arith.mulf %32, %32 : vector<8x4xf32>
    %cst_20 = arith.constant 1.000000e+00 : f32
    %34 = vector.broadcast %cst_20 : f32 to vector<8x4xf32>
    %35 = arith.subf %34, %33 : vector<8x4xf32>
    %cst_21 = arith.constant 0.000000e+00 : f32
    %cst_22 = arith.constant 1.000000e+00 : f32
    %36 = vector.broadcast %cst_21 : f32 to vector<8x4xf32>
    %37 = arith.maximumf %36, %35 : vector<8x4xf32>
    %38 = vector.broadcast %cst_22 : f32 to vector<8x4xf32>
    %39 = arith.minimumf %38, %37 : vector<8x4xf32>
    %40 = arith.mulf %28, %28 : vector<8x4xf32>
    %cst_23 = arith.constant -5.000000e-01 : f32
    %41 = vector.broadcast %cst_23 : f32 to vector<8x4xf32>
    %42 = arith.mulf %41, %40 : vector<8x4xf32>
    %43 = arith.subf %42, %26 : vector<8x4xf32>
    %cst_24 = arith.constant 0.918938517 : f32
    %44 = vector.broadcast %cst_24 : f32 to vector<8x4xf32>
    %45 = arith.subf %43, %44 : vector<8x4xf32>
    %cst_25 = arith.constant 9.99999997E-7 : f32
    %46 = vector.broadcast %cst_25 : f32 to vector<8x4xf32>
    %47 = arith.addf %39, %46 : vector<8x4xf32>
    %48 = math.log %47 : vector<8x4xf32>
    %49 = arith.subf %45, %48 : vector<8x4xf32>
    %cst_26 = arith.constant dense<0.000000e+00> : vector<8xf32>
    %50 = vector.multi_reduction <add>, %49, %cst_26 [1] : vector<8x4xf32> to vector<8xf32>
    %51 = vector.shape_cast %50 : vector<8xf32> to vector<8x1xf32>
    %c0_27 = arith.constant 0 : index
    %52 = memref.load %arg1[%c0_27] : memref<1xf32, #tpu.memory_space<smem>>
    %53 = vector.broadcast %52 : f32 to vector<8x4xf32>
    %54 = arith.mulf %32, %53 : vector<8x4xf32>
    %c0_28 = arith.constant 0 : index
    %c0_29 = arith.constant 0 : index
    %55 = vector.load %arg10[%c0_28, %c0_29] : memref<8x9xf32, #tpu.memory_space<vmem>>, vector<8x4xf32>
    tpu.vector_store %arg10[%c0_28, %c0_29], %54 {strides = array<i32>} : memref<8x9xf32, #tpu.memory_space<vmem>>, vector<8x4xf32>,
    %56 = vector.broadcast %52 : f32 to vector<8x4xf32>
    %57 = arith.mulf %31, %56 : vector<8x4xf32>
    %c0_30 = arith.constant 0 : index
    %c4 = arith.constant 4 : index
    %58 = vector.load %arg10[%c0_30, %c4] : memref<8x9xf32, #tpu.memory_space<vmem>>, vector<8x4xf32>
    tpu.vector_store %arg10[%c0_30, %c4], %57 {strides = array<i32>} : memref<8x9xf32, #tpu.memory_space<vmem>>, vector<8x4xf32>,
    %c0_31 = arith.constant 0 : index
    %c8 = arith.constant 8 : index
    %59 = vector.load %arg10[%c0_31, %c8] : memref<8x9xf32, #tpu.memory_space<vmem>>, vector<8x1xf32>
    tpu.vector_store %arg10[%c0_31, %c8], %51 {strides = array<i32>} : memref<8x9xf32, #tpu.memory_space<vmem>>, vector<8x1xf32>,
    return
  }
  func.func @transform_0(%arg0: i32) -> i32 {
    %c0_i32 = arith.constant 0 : i32
    %c0_i32_0 = arith.constant 0 : i32
    return %c0_i32 : i32
  }
  func.func @transform_1(%arg0: i32) -> (i32, i32) {
    %c0_i32 = arith.constant 0 : i32
    %c0_i32_0 = arith.constant 0 : i32
    return %arg0, %c0_i32 : i32, i32
  }
  func.func @transform_2(%arg0: i32) -> (i32, i32) {
    %c0_i32 = arith.constant 0 : i32
    %c0_i32_0 = arith.constant 0 : i32
    %c0_i32_1 = arith.constant 0 : i32
    return %c0_i32, %c0_i32_0 : i32, i32
  }
  func.func @transform_3(%arg0: i32) -> (i32, i32) {
    %c0_i32 = arith.constant 0 : i32
    %c0_i32_0 = arith.constant 0 : i32
    %c0_i32_1 = arith.constant 0 : i32
    return %c0_i32, %c0_i32_0 : i32, i32
  }
  func.func @transform_4(%arg0: i32) -> (i32, i32) {
    %c0_i32 = arith.constant 0 : i32
    %c0_i32_0 = arith.constant 0 : i32
    %c0_i32_1 = arith.constant 0 : i32
    return %c0_i32, %c0_i32_0 : i32, i32
  }
  func.func @transform_5(%arg0: i32) -> (i32, i32) {
    %c0_i32 = arith.constant 0 : i32
    %c0_i32_0 = arith.constant 0 : i32
    %c0_i32_1 = arith.constant 0 : i32
    return %c0_i32, %c0_i32_0 : i32, i32
  }
  func.func @transform_6(%arg0: i32) -> (i32, i32) {
    %c0_i32 = arith.constant 0 : i32
    %c0_i32_0 = arith.constant 0 : i32
    %c0_i32_1 = arith.constant 0 : i32
    return %c0_i32, %c0_i32_0 : i32, i32
  }
  func.func @transform_7(%arg0: i32) -> (i32, i32) {
    %c0_i32 = arith.constant 0 : i32
    %c0_i32_0 = arith.constant 0 : i32
    %c0_i32_1 = arith.constant 0 : i32
    return %c0_i32, %c0_i32_0 : i32, i32
  }
  func.func @transform_8(%arg0: i32) -> (i32, i32) {
    %c0_i32 = arith.constant 0 : i32
    %c0_i32_0 = arith.constant 0 : i32
    return %arg0, %c0_i32 : i32, i32
  }
  func.func @transform_9(%arg0: i32) -> (i32, i32) {
    %c0_i32 = arith.constant 0 : i32
    %c0_i32_0 = arith.constant 0 : i32
    return %arg0, %c0_i32 : i32, i32
  }
}

</mosaic_0001>

<llo_original>
// kernel: gaussian_policy_forward.1
$region0: #{gaussian_policy_forward.1}
  #allocation0 [shape = 'u32[]', space=smem, size = 0x4, offset = 0x4, fixed_abs, tag = 'smem constant byte address 0x4 - core index']
  #allocation1 [shape = 'u32[144,128]{1,0:T(1,128)}', space=vmem, size = 0x12000, scoped, tag = 'internal scratch']
  #allocation2 [shape = 'f32[1]{0:T(128)S(6)}', space=smem, size = 0x200, scoped, tag = 'scoped memory for gaussian_policy_forward.1']
  %s0 = inlined_call_operand.<no memory space> [shape: f32[1], index: 0, kind: input, shape index: {}]
  %s1 = inlined_call_operand.hbm [shape: f32[8,32], index: 1, kind: input, shape index: {}]
  %s2 = inlined_call_operand.vmem [shape: f32[32,32], index: 2, kind: input, shape index: {}]
  %s3 = inlined_call_operand.vmem [shape: f32[1,32], index: 3, kind: input, shape index: {}]
  %s4 = inlined_call_operand.vmem [shape: f32[32,32], index: 4, kind: input, shape index: {}]
  %s5 = inlined_call_operand.vmem [shape: f32[1,32], index: 5, kind: input, shape index: {}]
  %s6 = inlined_call_operand.vmem [shape: f32[32,8], index: 6, kind: input, shape index: {}]
  %s7 = inlined_call_operand.hbm [shape: f32[1,8], index: 7, kind: input, shape index: {}]
  %s8 = inlined_call_operand.vmem [shape: f32[8,4], index: 8, kind: input, shape index: {}]
  %s9 = inlined_call_operand.vmem [shape: f32[8,9], index: 9, kind: output, shape index: {}]
  %s10 = sld [smem:[#allocation0]]
  $region54: #{gaussian_policy_forward.1} parent=0
    _
  %s12 = ssub.s32 1, %s10
  %s13 = scalar_select 0, %s12, %s10
  %14 = sst [smem:[#allocation2]] %s0
  $region1: #{gaussian_policy_forward.1} parent=0
    #allocation3 [shape = 'u8[4096]{0}', space=vmem, size = 0x1000, scoped, tag = 'input window, operand 1, single buffered']
    #allocation4 [shape = 's32[1]{0}', space=sflag, size = 0x4, scoped, tag = 'scoped memory for gaussian_policy_forward.1']
    #allocation5 [shape = 'u8[512]{0}', space=vmem, size = 0x400, scoped, tag = 'input window, operand 7, single buffered']
    #allocation6 [shape = 's32[1]{0}', space=sflag, size = 0x4, scoped, tag = 'scoped memory for gaussian_policy_forward.1']
    %15 = vsyncpa [#allocation4], 0
    %16 = vsyncpa [#allocation6], 0
    // Predicated region
    $region2: #{gaussian_policy_forward.1} parent=1 // pred_check
      _
    $region3: #{gaussian_policy_forward.1} parent=1 // pred_check_branch
      %18 = sbr.rel (0) target = $region5
    $region4: #{gaussian_policy_forward.1} parent=1 // pred_region
      _
    $region5: #{gaussian_policy_forward.1} parent=1 // pred_fallthru
      _
    // Predicated region
    $region6: #{gaussian_policy_forward.1} parent=1 // pred_check
      _
    $region7: #{gaussian_policy_forward.1} parent=1 // pred_check_branch
      %20 = sbr.rel (0) target = $region9
    $region8: #{gaussian_policy_forward.1} parent=1 // pred_region
      %s22 = ssub.s32 128, 128
      %23 = vsyncadd [#allocation4], %s22
      %s25 = sshll.u32 [#allocation3], 4
      %s26 = int_to_ptr.vmem [resolvable:$true] %s25
      %28 = dma.hbm_to_vmem [thread:$0]  %s1, 128, %s26, [#allocation4]
    $region9: #{gaussian_policy_forward.1} parent=1 // pred_fallthru
      _
    // Predicated region
    $region10: #{gaussian_policy_forward.1} parent=1 // pred_check
      _
    $region11: #{gaussian_policy_forward.1} parent=1 // pred_check_branch
      %30 = sbr.rel (0) target = $region13
    $region12: #{gaussian_policy_forward.1} parent=1 // pred_region
      _
    $region13: #{gaussian_policy_forward.1} parent=1 // pred_fallthru
      _
    // Predicated region
    $region14: #{gaussian_policy_forward.1} parent=1 // pred_check
      _
    $region15: #{gaussian_policy_forward.1} parent=1 // pred_check_branch
      %32 = sbr.rel (0) target = $region17
    $region16: #{gaussian_policy_forward.1} parent=1 // pred_region
      _
    $region17: #{gaussian_policy_forward.1} parent=1 // pred_fallthru
      _
    // Predicated region
    $region18: #{gaussian_policy_forward.1} parent=1 // pred_check
      _
    $region19: #{gaussian_policy_forward.1} parent=1 // pred_check_branch
      %34 = sbr.rel (0) target = $region21
    $region20: #{gaussian_policy_forward.1} parent=1 // pred_region
      _
    $region21: #{gaussian_policy_forward.1} parent=1 // pred_fallthru
      _
    // Predicated region
    $region22: #{gaussian_policy_forward.1} parent=1 // pred_check
      _
    $region23: #{gaussian_policy_forward.1} parent=1 // pred_check_branch
      %36 = sbr.rel (0) target = $region25
    $region24: #{gaussian_policy_forward.1} parent=1 // pred_region
      _
    $region25: #{gaussian_policy_forward.1} parent=1 // pred_fallthru
      _
    // Predicated region
    $region26: #{gaussian_policy_forward.1} parent=1 // pred_check
      _
    $region27: #{gaussian_policy_forward.1} parent=1 // pred_check_branch
      %38 = sbr.rel (0) target = $region29
    $region28: #{gaussian_policy_forward.1} parent=1 // pred_region
      _
    $region29: #{gaussian_policy_forward.1} parent=1 // pred_fallthru
      _
    // Predicated region
    $region30: #{gaussian_policy_forward.1} parent=1 // pred_check
      _
    $region31: #{gaussian_policy_forward.1} parent=1 // pred_check_branch
      %40 = sbr.rel (0) target = $region33
    $region32: #{gaussian_policy_forward.1} parent=1 // pred_region
      %s42 = ssub.s32 16, 16
      %43 = vsyncadd [#allocation6], %s42
      %s45 = sshll.u32 [#allocation5], 4
      %s46 = int_to_ptr.vmem [resolvable:$true] %s45
      %48 = dma.hbm_to_vmem [thread:$0]  %s7, 16, %s46, [#allocation6]
    $region33: #{gaussian_policy_forward.1} parent=1 // pred_fallthru
      _
    // Predicated region
    $region34: #{gaussian_policy_forward.1} parent=1 // pred_check
      _
    $region35: #{gaussian_policy_forward.1} parent=1 // pred_check_branch
      %50 = sbr.rel (0) target = $region37
    $region36: #{gaussian_policy_forward.1} parent=1 // pred_region
      _
    $region37: #{gaussian_policy_forward.1} parent=1 // pred_fallthru
      _
    // Predicated region
    $region38: #{gaussian_policy_forward.1} parent=1 // pred_check
      _
    $region39: #{gaussian_policy_forward.1} parent=1 // pred_check_branch
      %52 = sbr.rel (0) target = $region41
    $region40: #{gaussian_policy_forward.1} parent=1 // pred_region
      %53 = dma.done [#allocation4], 128
    $region41: #{gaussian_policy_forward.1} parent=1 // pred_fallthru
      _
    // Predicated region
    $region42: #{gaussian_policy_forward.1} parent=1 // pred_check
      _
    $region43: #{gaussian_policy_forward.1} parent=1 // pred_check_branch
      %55 = sbr.rel (0) target = $region45
    $region44: #{gaussian_policy_forward.1} parent=1 // pred_region
      %56 = dma.done [#allocation6], 16
    $region45: #{gaussian_policy_forward.1} parent=1 // pred_fallthru
      _
    %v57 = vld [vmem:[#allocation3] sm:$0xff]
    %v58 = vld [vmem:[%s2] sm:$0xff]
    %v59 = vld [vmem:[%s2 + $0x8] sm:$0xff]
    %v60 = vld [vmem:[%s2 + $0x10] sm:$0xff]
    %v61 = vld [vmem:[%s2 + $0x18] sm:$0xff]
    %v62 = vld [vmem:[%s3] sm:$0x1]
    %v64 = vlaneseq
    %v65 = vshrl.u32 %v64, 7
    %v66 = vsub.s32 0, %v65
    %v67 = vrot.slane %v62, %v66
    %vm69 = vcmask 261120
    %v71 = vsel %vm69, %v57, 0
    %73 = vmatprep.subr.mxu0 0.0
    %74 = vmatpush1.msra.mxu0 %v58
    %75 = vmatprep.subr.mxu0 0.0
    %76 = vmatpush1.msra.mxu0 %v59
    %77 = vmatprep.subr.mxu0 0.0
    %78 = vmatpush1.msra.mxu0 %v60
    %79 = vmatprep.subr.mxu0 0.0
    %80 = vmatpush1.msra.mxu0 %v61
    %81 = vmatprep.subr.mxu0 0.0
    %82 = vmatpush1.msra.mxu0 0.0
    %83 = vmatprep.subr.mxu0 0.0
    %84 = vmatpush1.msra.mxu0 0.0
    %85 = vmatprep.subr.mxu0 0.0
    %86 = vmatpush1.msra.mxu0 0.0
    %87 = vmatprep.subr.mxu0 0.0
    %88 = vmatpush1.msra.mxu0 0.0
    %89 = vmatprep.subr.mxu0 0.0
    %90 = vmatpush1.msra.mxu0 0.0
    %91 = vmatprep.subr.mxu0 0.0
    %92 = vmatpush1.msra.mxu0 0.0
    %93 = vmatprep.subr.mxu0 0.0
    %94 = vmatpush1.msra.mxu0 0.0
    %95 = vmatprep.subr.mxu0 0.0
    %96 = vmatpush1.msra.mxu0 0.0
    %97 = vmatprep.subr.mxu0 0.0
    %98 = vmatpush1.msra.mxu0 0.0
    %99 = vmatprep.subr.mxu0 0.0
    %100 = vmatpush1.msra.mxu0 0.0
    %101 = vmatprep.subr.mxu0 0.0
    %102 = vmatpush1.msra.mxu0 0.0
    %103 = vmatprep.subr.mxu0 0.0
    %104 = vmatpush1.msra.mxu0 0.0
    %105 = vmatprep.subr.mxu0 0.0
    %106 = vmatpush1.msra.mxu0 0.0
    %107 = vmatprep.subr.mxu0 0.0
    %108 = vmatpush1.msra.mxu0 0.0
    %109 = vmatprep.subr.mxu0 0.0
    %110 = vmatpush1.msra.mxu0 0.0
    %111 = vmatprep.subr.mxu0 0.0
    %112 = vmatpush1.msra.mxu0 0.0
    %113 = vmatprep.subr.mxu0 0.0
    %114 = vmatpush1.msra.mxu0 0.0
    %115 = vmatprep.subr.mxu0 0.0
    %116 = vmatpush1.msra.mxu0 0.0
    %117 = vmatprep.subr.mxu0 0.0
    %118 = vmatpush1.msra.mxu0 0.0
    %119 = vmatprep.subr.mxu0 0.0
    %120 = vmatpush1.msra.mxu0 0.0
    %121 = vmatprep.subr.mxu0 0.0
    %122 = vmatpush1.msra.mxu0 0.0
    %123 = vmatprep.subr.mxu0 0.0
    %124 = vmatpush1.msra.mxu0 0.0
    %125 = vmatprep.subr.mxu0 0.0
    %126 = vmatpush1.msra.mxu0 0.0
    %127 = vmatprep.subr.mxu0 0.0
    %128 = vmatpush1.msra.mxu0 0.0
    %129 = vmatprep.subr.mxu0 0.0
    %130 = vmatpush1.msra.mxu0 0.0
    %131 = vmatprep.subr.mxu0 0.0
    %132 = vmatpush1.msra.mxu0 0.0
    %133 = vmatprep.subr.mxu0 0.0
    %134 = vmatpush1.msra.mxu0 0.0
    %135 = vmatprep.subr.mxu0 0.0
    %136 = vmatpush1.msra.mxu0 0.0
    %137 = vmatprep.mubr.f32.mxu0 0.0
    %138 = vmatmul.mubr.f32.gmra.mrb[0].mxu0 %v71
    %v139 = vpop.f32.mrb[0].mxu0
    %v140 = vadd.f32 %v67, %v139
    %v141 = vpop.f32.mrb[0].mxu0
    %142 = vdwg.mxu0
    %v143 = vtanh.pop %v140
    %v144 = vld [vmem:[%s4] sm:$0xff]
    %v145 = vld [vmem:[%s4 + $0x8] sm:$0xff]
    %v146 = vld [vmem:[%s4 + $0x10] sm:$0xff]
    %v147 = vld [vmem:[%s4 + $0x18] sm:$0xff]
    %v148 = vld [vmem:[%s5] sm:$0x1]
    %v150 = vlaneseq
    %v151 = vshrl.u32 %v150, 7
    %v152 = vsub.s32 0, %v151
    %v153 = vrot.slane %v148, %v152
    %v156 = vsel %vm69, %v143, 0
    %158 = vmatprep.subr.mxu0 0.0
    %159 = vmatpush1.msra.mxu0 %v144
    %160 = vmatprep.subr.mxu0 0.0
    %161 = vmatpush1.msra.mxu0 %v145
    %162 = vmatprep.subr.mxu0 0.0
    %163 = vmatpush1.msra.mxu0 %v146
    %164 = vmatprep.subr.mxu0 0.0
    %165 = vmatpush1.msra.mxu0 %v147
    %166 = vmatprep.subr.mxu0 0.0
    %167 = vmatpush1.msra.mxu0 0.0
    %168 = vmatprep.subr.mxu0 0.0
    %169 = vmatpush1.msra.mxu0 0.0
    %170 = vmatprep.subr.mxu0 0.0
    %171 = vmatpush1.msra.mxu0 0.0
    %172 = vmatprep.subr.mxu0 0.0
    %173 = vmatpush1.msra.mxu0 0.0
    %174 = vmatprep.subr.mxu0 0.0
    %175 = vmatpush1.msra.mxu0 0.0
    %176 = vmatprep.subr.mxu0 0.0
    %177 = vmatpush1.msra.mxu0 0.0
    %178 = vmatprep.subr.mxu0 0.0
    %179 = vmatpush1.msra.mxu0 0.0
    %180 = vmatprep.subr.mxu0 0.0
    %181 = vmatpush1.msra.mxu0 0.0
    %182 = vmatprep.subr.mxu0 0.0
    %183 = vmatpush1.msra.mxu0 0.0
    %184 = vmatprep.subr.mxu0 0.0
    %185 = vmatpush1.msra.mxu0 0.0
    %186 = vmatprep.subr.mxu0 0.0
    %187 = vmatpush1.msra.mxu0 0.0
    %188 = vmatprep.subr.mxu0 0.0
    %189 = vmatpush1.msra.mxu0 0.0
    %190 = vmatprep.subr.mxu0 0.0
    %191 = vmatpush1.msra.mxu0 0.0
    %192 = vmatprep.subr.mxu0 0.0
    %193 = vmatpush1.msra.mxu0 0.0
    %194 = vmatprep.subr.mxu0 0.0
    %195 = vmatpush1.msra.mxu0 0.0
    %196 = vmatprep.subr.mxu0 0.0
    %197 = vmatpush1.msra.mxu0 0.0
    %198 = vmatprep.subr.mxu0 0.0
    %199 = vmatpush1.msra.mxu0 0.0
    %200 = vmatprep.subr.mxu0 0.0
    %201 = vmatpush1.msra.mxu0 0.0
    %202 = vmatprep.subr.mxu0 0.0
    %203 = vmatpush1.msra.mxu0 0.0
    %204 = vmatprep.subr.mxu0 0.0
    %205 = vmatpush1.msra.mxu0 0.0
    %206 = vmatprep.subr.mxu0 0.0
    %207 = vmatpush1.msra.mxu0 0.0
    %208 = vmatprep.subr.mxu0 0.0
    %209 = vmatpush1.msra.mxu0 0.0
    %210 = vmatprep.subr.mxu0 0.0
    %211 = vmatpush1.msra.mxu0 0.0
    %212 = vmatprep.subr.mxu0 0.0
    %213 = vmatpush1.msra.mxu0 0.0
    %214 = vmatprep.subr.mxu0 0.0
    %215 = vmatpush1.msra.mxu0 0.0
    %216 = vmatprep.subr.mxu0 0.0
    %217 = vmatpush1.msra.mxu0 0.0
    %218 = vmatprep.subr.mxu0 0.0
    %219 = vmatpush1.msra.mxu0 0.0
    %220 = vmatprep.subr.mxu0 0.0
    %221 = vmatpush1.msra.mxu0 0.0
    %222 = vmatprep.mubr.f32.mxu0 0.0
    %223 = vmatmul.mubr.f32.gmra.mrb[0].mxu0 %v156
    %v224 = vpop.f32.mrb[0].mxu0
    %v225 = vadd.f32 %v153, %v224
    %v226 = vpop.f32.mrb[0].mxu0
    %227 = vdwg.mxu0
    %v228 = vtanh.pop %v225
    %v229 = vld [vmem:[%s6] sm:$0xff]
    %v230 = vld [vmem:[%s6 + $0x8] sm:$0xff]
    %v231 = vld [vmem:[%s6 + $0x10] sm:$0xff]
    %v232 = vld [vmem:[%s6 + $0x18] sm:$0xff]
    %v233 = vld [vmem:[#allocation5] sm:$0x1]
    %v235 = vlaneseq
    %v236 = vshrl.u32 %v235, 7
    %v237 = vsub.s32 0, %v236
    %v238 = vrot.slane %v233, %v237
    %v241 = vsel %vm69, %v228, 0
    %243 = vmatprep.subr.mxu0 0.0
    %244 = vmatpush1.msra.mxu0 %v229
    %245 = vmatprep.subr.mxu0 0.0
    %246 = vmatpush1.msra.mxu0 %v230
    %247 = vmatprep.subr.mxu0 0.0
    %248 = vmatpush1.msra.mxu0 %v231
    %249 = vmatprep.subr.mxu0 0.0
    %250 = vmatpush1.msra.mxu0 %v232
    %251 = vmatprep.subr.mxu0 0.0
    %252 = vmatpush1.msra.mxu0 0.0
    %253 = vmatprep.subr.mxu0 0.0
    %254 = vmatpush1.msra.mxu0 0.0
    %255 = vmatprep.subr.mxu0 0.0
    %256 = vmatpush1.msra.mxu0 0.0
    %257 = vmatprep.subr.mxu0 0.0
    %258 = vmatpush1.msra.mxu0 0.0
    %259 = vmatprep.subr.mxu0 0.0
    %260 = vmatpush1.msra.mxu0 0.0
    %261 = vmatprep.subr.mxu0 0.0
    %262 = vmatpush1.msra.mxu0 0.0
    %263 = vmatprep.subr.mxu0 0.0
    %264 = vmatpush1.msra.mxu0 0.0
    %265 = vmatprep.subr.mxu0 0.0
    %266 = vmatpush1.msra.mxu0 0.0
    %267 = vmatprep.subr.mxu0 0.0
    %268 = vmatpush1.msra.mxu0 0.0
    %269 = vmatprep.subr.mxu0 0.0
    %270 = vmatpush1.msra.mxu0 0.0
    %271 = vmatprep.subr.mxu0 0.0
    %272 = vmatpush1.msra.mxu0 0.0
    %273 = vmatprep.subr.mxu0 0.0
    %274 = vmatpush1.msra.mxu0 0.0
    %275 = vmatprep.subr.mxu0 0.0
    %276 = vmatpush1.msra.mxu0 0.0
    %277 = vmatprep.subr.mxu0 0.0
    %278 = vmatpush1.msra.mxu0 0.0
    %279 = vmatprep.subr.mxu0 0.0
    %280 = vmatpush1.msra.mxu0 0.0
    %281 = vmatprep.subr.mxu0 0.0
    %282 = vmatpush1.msra.mxu0 0.0
    %283 = vmatprep.subr.mxu0 0.0
    %284 = vmatpush1.msra.mxu0 0.0
    %285 = vmatprep.subr.mxu0 0.0
    %286 = vmatpush1.msra.mxu0 0.0
    %287 = vmatprep.subr.mxu0 0.0
    %288 = vmatpush1.msra.mxu0 0.0
    %289 = vmatprep.subr.mxu0 0.0
    %290 = vmatpush1.msra.mxu0 0.0
    %291 = vmatprep.subr.mxu0 0.0
    %292 = vmatpush1.msra.mxu0 0.0
    %293 = vmatprep.subr.mxu0 0.0
    %294 = vmatpush1.msra.mxu0 0.0
    %295 = vmatprep.subr.mxu0 0.0
    %296 = vmatpush1.msra.mxu0 0.0
    %297 = vmatprep.subr.mxu0 0.0
    %298 = vmatpush1.msra.mxu0 0.0
    %299 = vmatprep.subr.mxu0 0.0
    %300 = vmatpush1.msra.mxu0 0.0
    %301 = vmatprep.subr.mxu0 0.0
    %302 = vmatpush1.msra.mxu0 0.0
    %303 = vmatprep.subr.mxu0 0.0
    %304 = vmatpush1.msra.mxu0 0.0
    %305 = vmatprep.subr.mxu0 0.0
    %306 = vmatpush1.msra.mxu0 0.0
    %307 = vmatprep.mubr.f32.mxu0 0.0
    %308 = vmatmul.mubr.f32.gmra.mrb[0].mxu0 %v241
    %v309 = vpop.f32.mrb[0].mxu0
    %v310 = vadd.f32 %v238, %v309
    %v311 = vpop.f32.mrb[0].mxu0
    %312 = vdwg.mxu0
    %v313 = vtanh.pop %v310
    %v314 = vadd.f32 %v313, 1.0
    %v315 = vmul.f32 %v314, 11.0
    %v316 = vadd.f32 %v315, -20.0
    %v317 = vmul.f32 %v316, 1.442695
    %v318 = vpow.pop %v317
    %v319 = vld [vmem:[%s8] sm:$0xff]
    %321 = vrot.lane.b32.xlu0 %v319, 4
    %v322 = vpop.permute.xlu0 %321
    %v324 = vmul.f32 %v318, %v322
    %326 = vrot.lane.b32.xlu0 %v324, 124
    %v327 = vpop.permute.xlu0 %326
    %v329 = vadd.f32 %v310, %v327
    %v330 = vtanh.pop %v329
    %v331 = vmul.f32 %v330, %v330
    %v332 = vsub.f32 1.0, %v331
    %v333 = vmax.f32 %v332, 0.0
    %v334 = vmin.f32 %v333, 1.0
    %v335 = vmul.f32 %v319, %v319
    %v336 = vmul.f32 %v335, -0.5
    %338 = vrot.lane.b32.xlu0 %v316, 124
    %v339 = vpop.permute.xlu0 %338
    %v341 = vsub.f32 %v336, %v339
    %v342 = vsub.f32 %v341, 0.9189385
    %v343 = vadd.f32 %v334, 1e-06
    %v344 = vlog2.pop %v343
    %v345 = vmul.f32 %v344, 0.6931472
    %v346 = vsub.f32 %v342, %v345
    %vm347 = vcmask 31744
    %v348 = vsel %vm347, %v346, 0.0
    %349 = vadd.xlane.f32.xlu0 %v348
    %v350 = vpop.xlane.xlu0 %349
    %s351 = sld [smem:[#allocation2]]
    %v352 = vstv %s351
    %v353 = vmul.f32 %v330, %v352
    %354 = vst.msk [vmem:[%s9] sm:$0xff] %vm347, %v353
    %v355 = vmul.f32 %v313, %v352
    %357 = vrot.lane.b32.xlu0 %v355, 4
    %v358 = vpop.permute.xlu0 %357
    %vm360 = vcmask 64544
    %361 = vst.msk [vmem:[%s9] sm:$0xff] %vm360, %v358
    %vm362 = vcmask 72768
    %363 = vst.msk [vmem:[%s9] sm:$0xff] %vm362, %v350
    // Predicated region
    $region46: #{gaussian_policy_forward.1} parent=1 // pred_check
      _
    $region47: #{gaussian_policy_forward.1} parent=1 // pred_check_branch
      %365 = sbr.rel (0) target = $region49
    $region48: #{gaussian_policy_forward.1} parent=1 // pred_region
      _
    $region49: #{gaussian_policy_forward.1} parent=1 // pred_fallthru
      _
    // Predicated region
    $region50: #{gaussian_policy_forward.1} parent=1 // pred_check
      _
    $region51: #{gaussian_policy_forward.1} parent=1 // pred_check_branch
      %367 = sbr.rel (0) target = $region53
    $region52: #{gaussian_policy_forward.1} parent=1 // pred_region
      _
    $region53: #{gaussian_policy_forward.1} parent=1 // pred_fallthru
      _
    %368 = vsyncpa [#allocation4], 1
    %369 = vsyncpa [#allocation6], 1

</llo_original>
